<compile_context>
chip_gen: v5e
topology: v5e:2x2
jax: 0.10.0
libtpu: 0.0.40
codegen_flags: <defaults>
</compile_context>

<pallas_src>
import jax
import jax.numpy as jnp
from jax.experimental import pallas as pl
from jax.experimental.pallas import tpu as pltpu


def _sim_kernel(q_ref, p_ref, sim_ref):
    """Per query-tile: 'center'-normalized cosine similarity vs ALL prototypes.

    q_ref:   (QT, HW, C)        raw query features for this tile
    p_ref:   (way, HW, C)       raw prototype features (VMEM-resident)
    sim_ref: (QT, HW, way*HW)   similarity map, lane-dense layout
    """
    q = q_ref[...].astype(jnp.float32)
    p = p_ref[...].astype(jnp.float32)
    qt, hw, c = q.shape
    way = p.shape[0]

    # normalize_feature('center'): subtract per-location channel mean (f32).
    qc = q - jnp.mean(q, axis=-1, keepdims=True)
    pc = p - jnp.mean(p, axis=-1, keepdims=True)

    # Cosine normalization with eps=1e-8 (like F.cosine_similarity); rsqrt -> EUP.
    qn = qc * jax.lax.rsqrt(jnp.maximum(jnp.sum(qc * qc, axis=-1, keepdims=True), 1e-16))
    pn = pc * jax.lax.rsqrt(jnp.maximum(jnp.sum(pc * pc, axis=-1, keepdims=True), 1e-16))

    # Single wide MXU matmul: (QT*HW, C) @ (C, way*HW), bf16 operands / f32 acc.
    qn2 = qn.reshape(qt * hw, c).astype(jnp.bfloat16)
    pn2 = pn.reshape(way * hw, c).astype(jnp.bfloat16)
    sim = jax.lax.dot_general(qn2, pn2, (((1,), (1,)), ((), ())),
                              preferred_element_type=jnp.float32)
    sim_ref[...] = sim.reshape(qt, hw, way * hw)


def _choose_query_tile(nq, hw, c, way, vmem_budget_bytes=24 * 1024 * 1024):
    """Largest divisor of nq giving >=2 grid steps (when possible), M=QT*HW<=512,
    and a (conservatively double-buffered) working set fitting v7x's VMEM budget."""
    def vmem_bytes(qt):
        q_b = qt * hw * c * 4
        p_b = way * hw * c * 4
        o_b = qt * hw * way * hw * 4
        return 2 * (q_b + o_b) + 2 * p_b

    divisors = [d for d in range(1, nq + 1) if nq % d == 0]
    feasible = [d for d in divisors if vmem_bytes(d) <= vmem_budget_bytes] or [1]
    multi = [d for d in feasible if nq // d >= 2] or feasible   # >=2 tiles for v7x megacore
    small = [d for d in multi if d * hw <= 512]
    return max(small) if small else min(multi)


def deep_emd_metric(x1, x2, *, way_num=5, shot_num=5, temperature=12.5):
    """x1: query features NCHW (Nq, C, H, W); x2: support NCHW (way*shot, C, H, W).

    Returns (logits, similarity_map, weight_1, weight_2).
    """
    nq, c, h, w = x1.shape
    hw = h * w

    # forward(): shot handling (mean over shots for 5-shot).
    if shot_num == 5:
        proto = x2.reshape(way_num, shot_num, c, h, w).mean(axis=1)
    elif shot_num == 1:
        proto = x2
    else:
        raise ValueError("Unknown mode")
    # PyTorch's `proto.squeeze(0)` is a no-op for way_num > 1; for way_num == 1
    # we keep proto 4-D (squeezing would break the downstream reshape).
    way = proto.shape[0]

    # Layout: NCHW -> (N, HW, C).
    q = jnp.transpose(x1.reshape(nq, c, hw), (0, 2, 1)).astype(jnp.float32)
    p = jnp.transpose(proto.reshape(way, c, hw), (0, 2, 1)).astype(jnp.float32)

    qt = _choose_query_tile(nq, hw, c, way)
    n_tiles = nq // qt

    sim_wide = pl.pallas_call(
        _sim_kernel,
        grid=(n_tiles,),
        in_specs=[
            pl.BlockSpec((qt, hw, c), lambda i: (i, 0, 0)),    # query tile
            pl.BlockSpec((way, hw, c), lambda i: (0, 0, 0)),   # all protos, resident
        ],
        out_specs=pl.BlockSpec((qt, hw, way * hw), lambda i: (i, 0, 0)),
        out_shape=jax.ShapeDtypeStruct((nq, hw, way * hw), jnp.float32),
        compiler_params=pltpu.CompilerParams(
            dimension_semantics=("parallel",)),
    )(q, p)

    # (Nq, HW_q, way*HW_p) -> (Nq, way, HW_q, HW_p)   (cheap XLA layout plumbing)
    similarity_map = jnp.transpose(sim_wide.reshape(nq, hw, way, hw), (0, 2, 1, 3))

    # get_weight_vector: two tiny matvecs -> plain XLA (keeps kernel lane-dense).
    p_mean = jnp.mean(p, axis=1)   # (way, C)  adaptive_avg_pool2d -> 1x1
    q_mean = jnp.mean(q, axis=1)   # (Nq, C)
    weight_1 = jnp.maximum(jnp.einsum('qrc,jc->qjr', q, p_mean), 0.0) + 0.001  # (Nq, way, HW)
    weight_2 = jnp.maximum(jnp.einsum('jrc,qc->jqr', p, q_mean), 0.0) + 0.001  # (way, Nq, HW)

    num_node = weight_1.shape[-1]
    # TODO(synk): cv2.EMD (emd_inference_opencv) LP solver omitted — flow factor
    # on similarity_map is not applied before this reduction (flow treated as 1).
    logits = similarity_map.sum(axis=(-1, -2)) * (temperature / num_node)
    return logits, similarity_map, weight_1, weight_2


def _sim_reference(q, p):
    """Pure-JAX f32 reference of the similarity map (for a loose sanity check)."""
    qc = q - q.mean(-1, keepdims=True)
    pc = p - p.mean(-1, keepdims=True)
    qn = qc / jnp.maximum(jnp.linalg.norm(qc, axis=-1, keepdims=True), 1e-8)
    pn = pc / jnp.maximum(jnp.linalg.norm(pc, axis=-1, keepdims=True), 1e-8)
    return jnp.einsum('qrc,jsc->qjrs', qn, pn)


if __name__ == "__main__":
    key = jax.random.PRNGKey(0)
    way, shot = 5, 5
    c, h, w = 8, 4, 4
    nq = 6
    k1, k2 = jax.random.split(key)
    x1 = jax.random.normal(k1, (nq, c, h, w), jnp.float32)            # query
    x2 = jax.random.normal(k2, (way * shot, c, h, w), jnp.float32)    # support

    logits, sim, w1, w2 = deep_emd_metric(x1, x2, way_num=way, shot_num=shot)
    jax.block_until_ready((logits, sim, w1, w2))

    assert logits.shape == (nq, way)
    assert sim.shape == (nq, way, h * w, h * w)
    assert w1.shape == (nq, way, h * w)
    assert w2.shape == (way, nq, h * w)

    # Loose numeric sanity check (kernel matmul runs in bf16 with f32 accumulation).
    proto = x2.reshape(way, shot, c, h, w).mean(axis=1)
    q_ref = jnp.transpose(x1.reshape(nq, c, h * w), (0, 2, 1))
    p_ref = jnp.transpose(proto.reshape(way, c, h * w), (0, 2, 1))
    sim_ref = _sim_reference(q_ref, p_ref)
    assert float(jnp.max(jnp.abs(sim - sim_ref))) < 0.06

    print("KERNEL_OK")
</pallas_src>

<mosaic_0001>
module attributes {stable_mosaic.version = 11 : i64} {
  func.func @_sim_kernel(%arg0: i32, %arg1: memref<3x16x8xf32, #tpu.memory_space<vmem>>, %arg2: memref<5x16x8xf32, #tpu.memory_space<vmem>>, %arg3: memref<3x16x80xf32, #tpu.memory_space<vmem>>) attributes {dimension_semantics = [#tpu.dimension_semantics<parallel>], iteration_bounds = array<i64: 2>, scalar_prefetch = 0 : i64, scratch_operands = 0 : i64, tpu.core_type = #tpu.core_type<tc>, window_params = [{transform_indices = @transform_0, window_bounds = array<i64: 3, 16, 8>}, {pipeline_mode = #tpu.pipeline_mode<synchronous>, transform_indices = @transform_1, window_bounds = array<i64: 5, 16, 8>}, {transform_indices = @transform_2, window_bounds = array<i64: 3, 16, 80>}]} {
    %c0 = arith.constant 0 : index
    %c0_0 = arith.constant 0 : index
    %c0_1 = arith.constant 0 : index
    %0 = vector.load %arg1[%c0, %c0_0, %c0_1] : memref<3x16x8xf32, #tpu.memory_space<vmem>>, vector<3x16x8xf32>
    %c0_2 = arith.constant 0 : index
    %c0_3 = arith.constant 0 : index
    %c0_4 = arith.constant 0 : index
    %1 = vector.load %arg2[%c0_2, %c0_3, %c0_4] : memref<5x16x8xf32, #tpu.memory_space<vmem>>, vector<5x16x8xf32>
    %cst = arith.constant dense<0.000000e+00> : vector<3x16xf32>
    %2 = vector.multi_reduction <add>, %0, %cst [2] : vector<3x16x8xf32> to vector<3x16xf32>
    %3 = vector.shape_cast %2 : vector<3x16xf32> to vector<3x16x1xf32>
    %cst_5 = arith.constant 8.000000e+00 : f32
    %4 = vector.broadcast %cst_5 : f32 to vector<3x16x1xf32>
    %5 = arith.divf %3, %4 : vector<3x16x1xf32>
    %6 = vector.broadcast %5 : vector<3x16x1xf32> to vector<3x16x8xf32>
    %7 = arith.subf %0, %6 : vector<3x16x8xf32>
    %cst_6 = arith.constant dense<0.000000e+00> : vector<5x16xf32>
    %8 = vector.multi_reduction <add>, %1, %cst_6 [2] : vector<5x16x8xf32> to vector<5x16xf32>
    %9 = vector.shape_cast %8 : vector<5x16xf32> to vector<5x16x1xf32>
    %cst_7 = arith.constant 8.000000e+00 : f32
    %10 = vector.broadcast %cst_7 : f32 to vector<5x16x1xf32>
    %11 = arith.divf %9, %10 : vector<5x16x1xf32>
    %12 = vector.broadcast %11 : vector<5x16x1xf32> to vector<5x16x8xf32>
    %13 = arith.subf %1, %12 : vector<5x16x8xf32>
    %14 = arith.mulf %7, %7 : vector<3x16x8xf32>
    %cst_8 = arith.constant dense<0.000000e+00> : vector<3x16xf32>
    %15 = vector.multi_reduction <add>, %14, %cst_8 [2] : vector<3x16x8xf32> to vector<3x16xf32>
    %16 = vector.shape_cast %15 : vector<3x16xf32> to vector<3x16x1xf32>
    %cst_9 = arith.constant 1.000000e-16 : f32
    %17 = vector.broadcast %cst_9 : f32 to vector<3x16x1xf32>
    %18 = arith.maximumf %16, %17 : vector<3x16x1xf32>
    %19 = math.rsqrt %18 : vector<3x16x1xf32>
    %20 = vector.broadcast %19 : vector<3x16x1xf32> to vector<3x16x8xf32>
    %21 = arith.mulf %7, %20 : vector<3x16x8xf32>
    %22 = arith.mulf %13, %13 : vector<5x16x8xf32>
    %cst_10 = arith.constant dense<0.000000e+00> : vector<5x16xf32>
    %23 = vector.multi_reduction <add>, %22, %cst_10 [2] : vector<5x16x8xf32> to vector<5x16xf32>
    %24 = vector.shape_cast %23 : vector<5x16xf32> to vector<5x16x1xf32>
    %cst_11 = arith.constant 1.000000e-16 : f32
    %25 = vector.broadcast %cst_11 : f32 to vector<5x16x1xf32>
    %26 = arith.maximumf %24, %25 : vector<5x16x1xf32>
    %27 = math.rsqrt %26 : vector<5x16x1xf32>
    %28 = vector.broadcast %27 : vector<5x16x1xf32> to vector<5x16x8xf32>
    %29 = arith.mulf %13, %28 : vector<5x16x8xf32>
    %30 = vector.shape_cast %21 : vector<3x16x8xf32> to vector<48x8xf32>
    %31 = arith.truncf %30 : vector<48x8xf32> to vector<48x8xbf16>
    %32 = vector.shape_cast %29 : vector<5x16x8xf32> to vector<80x8xf32>
    %33 = arith.truncf %32 : vector<80x8xf32> to vector<80x8xbf16>
    %cst_12 = arith.constant dense<0.000000e+00> : vector<48x80xf32>
    %34 = tpu.matmul %31, %33, %cst_12 {dimension_numbers = #tpu.dot_dimension_numbers<[1], [1], [0], [0], [0, 0, 1, 0], [], []>} : vector<48x8xbf16>, vector<80x8xbf16>, vector<48x80xf32> -> vector<48x80xf32>
    %35 = vector.shape_cast %34 : vector<48x80xf32> to vector<3x16x80xf32>
    %c0_13 = arith.constant 0 : index
    %c0_14 = arith.constant 0 : index
    %c0_15 = arith.constant 0 : index
    %36 = vector.load %arg3[%c0_13, %c0_14, %c0_15] : memref<3x16x80xf32, #tpu.memory_space<vmem>>, vector<3x16x80xf32>
    tpu.vector_store %arg3[%c0_13, %c0_14, %c0_15], %35 {strides = array<i32>} : memref<3x16x80xf32, #tpu.memory_space<vmem>>, vector<3x16x80xf32>,
    return
  }
  func.func @transform_0(%arg0: i32) -> (i32, i32, i32) {
    %c0_i32 = arith.constant 0 : i32
    %c0_i32_0 = arith.constant 0 : i32
    %c0_i32_1 = arith.constant 0 : i32
    return %arg0, %c0_i32, %c0_i32_0 : i32, i32, i32
  }
  func.func @transform_1(%arg0: i32) -> (i32, i32, i32) {
    %c0_i32 = arith.constant 0 : i32
    %c0_i32_0 = arith.constant 0 : i32
    %c0_i32_1 = arith.constant 0 : i32
    %c0_i32_2 = arith.constant 0 : i32
    return %c0_i32, %c0_i32_0, %c0_i32_1 : i32, i32, i32
  }
  func.func @transform_2(%arg0: i32) -> (i32, i32, i32) {
    %c0_i32 = arith.constant 0 : i32
    %c0_i32_0 = arith.constant 0 : i32
    %c0_i32_1 = arith.constant 0 : i32
    return %arg0, %c0_i32, %c0_i32_0 : i32, i32, i32
  }
}

</mosaic_0001>

<llo_original>
// kernel: tpu_custom_call.1
$region0: #{tpu_custom_call.1}
  #allocation0 [shape = 'u32[]', space=smem, size = 0x4, offset = 0x4, fixed_abs, tag = 'smem constant byte address 0x4 - core index']
  #allocation1 [shape = 'u32[72,128]{1,0:T(1,128)}', space=vmem, size = 0x9000, scoped, tag = 'internal scratch']
  %s0 = inlined_call_operand.vmem [shape: f32[6,16,8], index: 0, kind: input, shape index: {}]
  %s1 = inlined_call_operand.vmem [shape: f32[5,16,8], index: 1, kind: input, shape index: {}]
  %s2 = inlined_call_operand.hbm [shape: f32[6,16,80], index: 2, kind: output, shape index: {}]
  %s3 = sld [smem:[#allocation0]]
  $region41: #{tpu_custom_call.1} parent=0
    _
  %s5 = ssub.s32 1, %s3
  %s6 = scalar_select 0, %s5, %s3
  $region1: #{tpu_custom_call.1} parent=0
    #allocation2 [shape = 'u8[49152]{0}', space=vmem, size = 0xc000, scoped, tag = 'output window, operand 0']
    #allocation3 [shape = 's32[2]{0}', space=sflag, size = 0x8, scoped, tag = 'scoped memory for tpu_custom_call.1']
    %7 = vsyncpa [#allocation3], 0
    %s8 = scalar_lea.sflag [#allocation3], 1
    %9 = vsyncpa %s8, 0
    loop: start=0, step=1, limit=4
    $region2: #{tpu_custom_call.1} parent=1 // loop_pre_header
      _
    $region3: #{tpu_custom_call.1} parent=1 // loop_header
      %s11 = sphi 0, %s15
      %p12 = scmp.ge.s32.totalorder %s11, 4
      %s21 = sphi 0, %s23
      %s24 = sphi 0, %s21
      %s25 = sphi 0, %s24
      %s41 = sphi 0, %s25
      %s45 = sphi 0, %s45
      %s47 = sphi 0, %s45
      %s48 = sphi 0, %s47
      %s62 = sphi 0, %s48
      %s68 = sphi 0, %s70
      %s71 = sphi 0, %s68
      %s72 = sphi 0, %s71
      %s88 = sphi 0, %s72
    $region4: #{tpu_custom_call.1} parent=1 // loop_header_branch
      %14 = sbr.rel (%p12) target = $region8
    $region5: #{tpu_custom_call.1} parent=1 // loop_body
      %s16 = ssub.s32 %s11, 1
      %s17 = ssub.s32 %s11, 2
      %s18 = sadd.s32 %s11, 1
      %s19 = ssub.s32 %s11, %s18
      %p20 = scmp.eq.s32.totalorder %s19, 0
      %s22 = sadd.s32 %s21, 1
      %s23 = scalar_select %p20, %s21, %s22
      %p26 = pneg %p20
      %p27 = scmp.eq.s32.totalorder %s11, 1
      %p28 = por %p26, %p27
      %p29 = scmp.ne.s32.totalorder %s21, %s24
      %p30 = scmp.eq.s32.totalorder %s11, 0
      %p31 = por %p29, %p30
      %p32 = scmp.ne.s32.totalorder %s21, %s24
      %p33 = scmp.eq.s32.totalorder %s16, 1
      %p34 = por %p32, %p33
      %p35 = scmp.ne.s32.totalorder %s24, %s25
      %p36 = scmp.eq.s32.totalorder %s16, 0
      %p37 = por %p35, %p36
      %p38 = scmp.ne.s32.totalorder %s24, %s25
      %p39 = scmp.eq.s32.totalorder %s17, 1
      %p40 = por %p38, %p39
      %p42 = scmp.ne.s32.totalorder %s25, %s41
      %p43 = scmp.eq.s32.totalorder %s17, 0
      %p44 = por %p42, %p43
      %s46 = sadd.s32 %s45, 1
      %p49 = scmp.eq.s32.totalorder %s11, 1
      %p50 = scmp.ne.s32.totalorder %s45, %s47
      %p51 = scmp.eq.s32.totalorder %s11, 0
      %p52 = por %p50, %p51
      %p53 = scmp.ne.s32.totalorder %s45, %s47
      %p54 = scmp.eq.s32.totalorder %s16, 1
      %p55 = por %p53, %p54
      %p56 = scmp.ne.s32.totalorder %s47, %s48
      %p57 = scmp.eq.s32.totalorder %s16, 0
      %p58 = por %p56, %p57
      %p59 = scmp.ne.s32.totalorder %s47, %s48
      %p60 = scmp.eq.s32.totalorder %s17, 1
      %p61 = por %p59, %p60
      %p63 = scmp.ne.s32.totalorder %s48, %s62
      %p64 = scmp.eq.s32.totalorder %s17, 0
      %p65 = por %p63, %p64
      %s66 = ssub.s32 %s11, %s18
      %p67 = scmp.eq.s32.totalorder %s66, 0
      %s69 = sadd.s32 %s68, 1
      %s70 = scalar_select %p67, %s68, %s69
      %p73 = pneg %p67
      %p74 = scmp.eq.s32.totalorder %s11, 1
      %p75 = por %p73, %p74
      %p76 = scmp.ne.s32.totalorder %s68, %s71
      %p77 = scmp.eq.s32.totalorder %s11, 0
      %p78 = por %p76, %p77
      %p79 = scmp.ne.s32.totalorder %s68, %s71
      %p80 = scmp.eq.s32.totalorder %s16, 1
      %p81 = por %p79, %p80
      %p82 = scmp.ne.s32.totalorder %s71, %s72
      %p83 = scmp.eq.s32.totalorder %s16, 0
      %p84 = por %p82, %p83
      %p85 = scmp.ne.s32.totalorder %s71, %s72
      %p86 = scmp.eq.s32.totalorder %s17, 1
      %p87 = por %p85, %p86
      %p89 = scmp.ne.s32.totalorder %s72, %s88
      %p90 = scmp.eq.s32.totalorder %s17, 0
      %p91 = por %p89, %p90
      %p92 = scmp.le.s32.totalorder 1, %s11
      %p93 = scmp.lt.s32.totalorder %s11, 3
      %p94 = pnand %p92, %p93
      %p95 = pneg %p94
      // Predicated region
      $region9: #{tpu_custom_call.1} parent=5 // pred_check
        _
      $region10: #{tpu_custom_call.1} parent=5 // pred_check_branch
        %97 = sbr.rel (%p94) target = $region12
      $region11: #{tpu_custom_call.1} parent=5 // pred_region
        %s98 = ssub.s32 %s11, 1
        // Predicated region
        $region13: #{tpu_custom_call.1} parent=11 // pred_check
          %p99 = pneg %p58
        $region14: #{tpu_custom_call.1} parent=11 // pred_check_branch
          %101 = sbr.rel (%p99) target = $region16
        $region15: #{tpu_custom_call.1} parent=11 // pred_region
          _
        $region16: #{tpu_custom_call.1} parent=11 // pred_fallthru
          _
      $region12: #{tpu_custom_call.1} parent=5 // pred_fallthru
        _
      %p102 = scmp.lt.s32.totalorder %s11, 2
      // Predicated region
      $region17: #{tpu_custom_call.1} parent=5 // pred_check
        %p103 = pneg %p102
      $region18: #{tpu_custom_call.1} parent=5 // pred_check_branch
        %105 = sbr.rel (%p103) target = $region20
      $region19: #{tpu_custom_call.1} parent=5 // pred_region
        // Predicated region
        $region21: #{tpu_custom_call.1} parent=19 // pred_check
          %p106 = pneg %p31
        $region22: #{tpu_custom_call.1} parent=19 // pred_check_branch
          %108 = sbr.rel (%p106) target = $region24
        $region23: #{tpu_custom_call.1} parent=19 // pred_region
          %s109 = smul.u32 3, %s11
          %p110 = scmp.lt.s32.totalorder %s109, 5
          %s111 = scalar_select %p110, %s109, 5
          %s112 = smul.addr %s111, 2
          %s113 = smul.addr %s112, 8
          %s114 = scalar_lea.vmem %s0, %s113
          %s115 = smul.u32 3, %s11
        $region24: #{tpu_custom_call.1} parent=19 // pred_fallthru
          _
      $region20: #{tpu_custom_call.1} parent=5 // pred_fallthru
        _
      %p116 = scmp.le.s32.totalorder 1, %s11
      %p117 = scmp.lt.s32.totalorder %s11, 3
      %p118 = pnand %p116, %p117
      %p119 = pneg %p118
      // Predicated region
      $region25: #{tpu_custom_call.1} parent=5 // pred_check
        _
      $region26: #{tpu_custom_call.1} parent=5 // pred_check_branch
        %121 = sbr.rel (%p118) target = $region28
      $region27: #{tpu_custom_call.1} parent=5 // pred_region
        %s122 = ssub.s32 %s11, 1
        %s123 = smul.u32 3, %s16
        %p124 = scmp.lt.s32.totalorder %s123, 5
        %s125 = scalar_select %p124, %s123, 5
        %s126 = smul.addr %s125, 2
        %s127 = smul.addr %s126, 8
        %s128 = scalar_lea.vmem %s0, %s127
        %p129 = pneg %p37
        %p130 = pneg %p34
        %p131 = pneg %p58
        %p132 = pneg %p55
        %p133 = pneg %p84
        %p134 = pneg %p81
        %s135 = sand.u32 %s71, 1
        %s136 = scalar_lea.sflag [#allocation3], %s135
        %s137 = sand.u32 %s71, 1
        %s138 = smul.addr %s137, 48
        %s139 = scalar_lea.vmem [#allocation2], %s138
        %s140 = smul.u32 3, %s16
        %p141 = scmp.lt.s32.totalorder %s140, 5
        %s142 = scalar_select %p141, %s140, 5
        %s143 = smul.addr %s142, 2
        %s144 = smul.addr %s143, 8
        %s145 = scalar_lea.vmem %s0, %s144
        %s146 = smul.u32 3, %s16
        %s147 = smul.u32 3, %s16
        %v149 = vld [vmem:[%s145] sm:$0xff]
        %v150 = vld [vmem:[%s145 + $0x8] sm:$0xff]
        %v151 = vld [vmem:[%s145 + $0x10] sm:$0xff]
        %v152 = vld [vmem:[%s145 + $0x18] sm:$0xff]
        %v153 = vld [vmem:[%s145 + $0x20] sm:$0xff]
        %v154 = vld [vmem:[%s145 + $0x28] sm:$0xff]
        %v155 = vld [vmem:[%s1] sm:$0xff]
        %v156 = vld [vmem:[%s1 + $0x8] sm:$0xff]
        %v157 = vld [vmem:[%s1 + $0x10] sm:$0xff]
        %v158 = vld [vmem:[%s1 + $0x18] sm:$0xff]
        %v159 = vld [vmem:[%s1 + $0x20] sm:$0xff]
        %v160 = vld [vmem:[%s1 + $0x28] sm:$0xff]
        %v161 = vld [vmem:[%s1 + $0x30] sm:$0xff]
        %v162 = vld [vmem:[%s1 + $0x38] sm:$0xff]
        %v163 = vld [vmem:[%s1 + $0x40] sm:$0xff]
        %v164 = vld [vmem:[%s1 + $0x48] sm:$0xff]
        %vm165 = vcmask 64512
        %v166 = vsel %vm165, %v149, 0.0
        %167 = vadd.xlane.f32.xlu0 %v166
        %v168 = vpop.xlane.xlu0 %167
        %v169 = vsel %vm165, %v150, 0.0
        %170 = vadd.xlane.f32.xlu0 %v169
        %v171 = vpop.xlane.xlu0 %170
        %v172 = vsel %vm165, %v151, 0.0
        %173 = vadd.xlane.f32.xlu0 %v172
        %v174 = vpop.xlane.xlu0 %173
        %v175 = vsel %vm165, %v152, 0.0
        %176 = vadd.xlane.f32.xlu0 %v175
        %v177 = vpop.xlane.xlu0 %176
        %v178 = vsel %vm165, %v153, 0.0
        %179 = vadd.xlane.f32.xlu0 %v178
        %v180 = vpop.xlane.xlu0 %179
        %v181 = vsel %vm165, %v154, 0.0
        %182 = vadd.xlane.f32.xlu0 %v181
        %v183 = vpop.xlane.xlu0 %182
        %v184 = vrcp.pop 8.0
        %v185 = vmul.f32 8.0, %v184
        %v186 = vsub.f32 1.0, %v185
        %v187 = vmul.f32 %v184, %v186
        %v188 = vadd.f32 %v184, %v187
        %vm189 = vweird.f32 %v184
        %v190 = vsel %vm189, %v184, %v188
        %v191 = vmul.f32 %v168, %v190
        %v192 = vmul.f32 %v171, %v190
        %v193 = vmul.f32 %v174, %v190
        %v194 = vmul.f32 %v177, %v190
        %v195 = vmul.f32 %v180, %v190
        %v196 = vmul.f32 %v183, %v190
        %v197 = vsub.f32 %v149, %v191
        %v198 = vsub.f32 %v150, %v192
        %v199 = vsub.f32 %v151, %v193
        %v200 = vsub.f32 %v152, %v194
        %v201 = vsub.f32 %v153, %v195
        %v202 = vsub.f32 %v154, %v196
        %v203 = vsel %vm165, %v155, 0.0
        %204 = vadd.xlane.f32.xlu0 %v203
        %v205 = vpop.xlane.xlu0 %204
        %v206 = vsel %vm165, %v156, 0.0
        %207 = vadd.xlane.f32.xlu0 %v206
        %v208 = vpop.xlane.xlu0 %207
        %v209 = vsel %vm165, %v157, 0.0
        %210 = vadd.xlane.f32.xlu0 %v209
        %v211 = vpop.xlane.xlu0 %210
        %v212 = vsel %vm165, %v158, 0.0
        %213 = vadd.xlane.f32.xlu0 %v212
        %v214 = vpop.xlane.xlu0 %213
        %v215 = vsel %vm165, %v159, 0.0
        %216 = vadd.xlane.f32.xlu0 %v215
        %v217 = vpop.xlane.xlu0 %216
        %v218 = vsel %vm165, %v160, 0.0
        %219 = vadd.xlane.f32.xlu0 %v218
        %v220 = vpop.xlane.xlu0 %219
        %v221 = vsel %vm165, %v161, 0.0
        %222 = vadd.xlane.f32.xlu0 %v221
        %v223 = vpop.xlane.xlu0 %222
        %v224 = vsel %vm165, %v162, 0.0
        %225 = vadd.xlane.f32.xlu0 %v224
        %v226 = vpop.xlane.xlu0 %225
        %v227 = vsel %vm165, %v163, 0.0
        %228 = vadd.xlane.f32.xlu0 %v227
        %v229 = vpop.xlane.xlu0 %228
        %v230 = vsel %vm165, %v164, 0.0
        %231 = vadd.xlane.f32.xlu0 %v230
        %v232 = vpop.xlane.xlu0 %231
        %v233 = vmul.f32 %v205, %v190
        %v234 = vmul.f32 %v208, %v190
        %v235 = vmul.f32 %v211, %v190
        %v236 = vmul.f32 %v214, %v190
        %v237 = vmul.f32 %v217, %v190
        %v238 = vmul.f32 %v220, %v190
        %v239 = vmul.f32 %v223, %v190
        %v240 = vmul.f32 %v226, %v190
        %v241 = vmul.f32 %v229, %v190
        %v242 = vmul.f32 %v232, %v190
        %v243 = vsub.f32 %v155, %v233
        %v244 = vsub.f32 %v156, %v234
        %v245 = vsub.f32 %v157, %v235
        %v246 = vsub.f32 %v158, %v236
        %v247 = vsub.f32 %v159, %v237
        %v248 = vsub.f32 %v160, %v238
        %v249 = vsub.f32 %v161, %v239
        %v250 = vsub.f32 %v162, %v240
        %v251 = vsub.f32 %v163, %v241
        %v252 = vsub.f32 %v164, %v242
        %v253 = vmul.f32 %v197, %v197
        %v254 = vmul.f32 %v198, %v198
        %v255 = vmul.f32 %v199, %v199
        %v256 = vmul.f32 %v200, %v200
        %v257 = vmul.f32 %v201, %v201
        %v258 = vmul.f32 %v202, %v202
        %v259 = vsel %vm165, %v253, 0.0
        %260 = vadd.xlane.f32.xlu0 %v259
        %v261 = vpop.xlane.xlu0 %260
        %v262 = vsel %vm165, %v254, 0.0
        %263 = vadd.xlane.f32.xlu0 %v262
        %v264 = vpop.xlane.xlu0 %263
        %v265 = vsel %vm165, %v255, 0.0
        %266 = vadd.xlane.f32.xlu0 %v265
        %v267 = vpop.xlane.xlu0 %266
        %v268 = vsel %vm165, %v256, 0.0
        %269 = vadd.xlane.f32.xlu0 %v268
        %v270 = vpop.xlane.xlu0 %269
        %v271 = vsel %vm165, %v257, 0.0
        %272 = vadd.xlane.f32.xlu0 %v271
        %v273 = vpop.xlane.xlu0 %272
        %v274 = vsel %vm165, %v258, 0.0
        %275 = vadd.xlane.f32.xlu0 %v274
        %v276 = vpop.xlane.xlu0 %275
        %v277 = vmax.f32 %v261, 1e-16
        %v278 = vmax.f32 %v264, 1e-16
        %v279 = vmax.f32 %v267, 1e-16
        %v280 = vmax.f32 %v270, 1e-16
        %v281 = vmax.f32 %v273, 1e-16
        %v282 = vmax.f32 %v276, 1e-16
        %v283 = vrsqrt.pop %v277
        %v284 = vmul.f32 %v283, %v277
        %v285 = vmul.f32 %v284, %v283
        %v286 = vmul.f32 0.5, %v285
        %v287 = vsub.f32 1.5, %v286
        %v288 = vmul.f32 %v283, %v287
        %vm289 = vweird.f32 %v277
        %vm290 = vweird.f32 %v283
        %vm291 = vmor %vm289, %vm290
        %v292 = vsel %vm291, %v283, %v288
        %v293 = vrsqrt.pop %v278
        %v294 = vmul.f32 %v293, %v278
        %v295 = vmul.f32 %v294, %v293
        %v296 = vmul.f32 0.5, %v295
        %v297 = vsub.f32 1.5, %v296
        %v298 = vmul.f32 %v293, %v297
        %vm299 = vweird.f32 %v278
        %vm300 = vweird.f32 %v293
        %vm301 = vmor %vm299, %vm300
        %v302 = vsel %vm301, %v293, %v298
        %v303 = vrsqrt.pop %v279
        %v304 = vmul.f32 %v303, %v279
        %v305 = vmul.f32 %v304, %v303
        %v306 = vmul.f32 0.5, %v305
        %v307 = vsub.f32 1.5, %v306
        %v308 = vmul.f32 %v303, %v307
        %vm309 = vweird.f32 %v279
        %vm310 = vweird.f32 %v303
        %vm311 = vmor %vm309, %vm310
        %v312 = vsel %vm311, %v303, %v308
        %v313 = vrsqrt.pop %v280
        %v314 = vmul.f32 %v313, %v280
        %v315 = vmul.f32 %v314, %v313
        %v316 = vmul.f32 0.5, %v315
        %v317 = vsub.f32 1.5, %v316
        %v318 = vmul.f32 %v313, %v317
        %vm319 = vweird.f32 %v280
        %vm320 = vweird.f32 %v313
        %vm321 = vmor %vm319, %vm320
        %v322 = vsel %vm321, %v313, %v318
        %v323 = vrsqrt.pop %v281
        %v324 = vmul.f32 %v323, %v281
        %v325 = vmul.f32 %v324, %v323
        %v326 = vmul.f32 0.5, %v325
        %v327 = vsub.f32 1.5, %v326
        %v328 = vmul.f32 %v323, %v327
        %vm329 = vweird.f32 %v281
        %vm330 = vweird.f32 %v323
        %vm331 = vmor %vm329, %vm330
        %v332 = vsel %vm331, %v323, %v328
        %v333 = vrsqrt.pop %v282
        %v334 = vmul.f32 %v333, %v282
        %v335 = vmul.f32 %v334, %v333
        %v336 = vmul.f32 0.5, %v335
        %v337 = vsub.f32 1.5, %v336
        %v338 = vmul.f32 %v333, %v337
        %vm339 = vweird.f32 %v282
        %vm340 = vweird.f32 %v333
        %vm341 = vmor %vm339, %vm340
        %v342 = vsel %vm341, %v333, %v338
        %v343 = vmul.f32 %v197, %v292
        %v344 = vmul.f32 %v198, %v302
        %v345 = vmul.f32 %v199, %v312
        %v346 = vmul.f32 %v200, %v322
        %v347 = vmul.f32 %v201, %v332
        %v348 = vmul.f32 %v202, %v342
        %v349 = vmul.f32 %v243, %v243
        %v350 = vmul.f32 %v244, %v244
        %v351 = vmul.f32 %v245, %v245
        %v352 = vmul.f32 %v246, %v246
        %v353 = vmul.f32 %v247, %v247
        %v354 = vmul.f32 %v248, %v248
        %v355 = vmul.f32 %v249, %v249
        %v356 = vmul.f32 %v250, %v250
        %v357 = vmul.f32 %v251, %v251
        %v358 = vmul.f32 %v252, %v252
        %v359 = vsel %vm165, %v349, 0.0
        %360 = vadd.xlane.f32.xlu0 %v359
        %v361 = vpop.xlane.xlu0 %360
        %v362 = vsel %vm165, %v350, 0.0
        %363 = vadd.xlane.f32.xlu0 %v362
        %v364 = vpop.xlane.xlu0 %363
        %v365 = vsel %vm165, %v351, 0.0
        %366 = vadd.xlane.f32.xlu0 %v365
        %v367 = vpop.xlane.xlu0 %366
        %v368 = vsel %vm165, %v352, 0.0
        %369 = vadd.xlane.f32.xlu0 %v368
        %v370 = vpop.xlane.xlu0 %369
        %v371 = vsel %vm165, %v353, 0.0
        %372 = vadd.xlane.f32.xlu0 %v371
        %v373 = vpop.xlane.xlu0 %372
        %v374 = vsel %vm165, %v354, 0.0
        %375 = vadd.xlane.f32.xlu0 %v374
        %v376 = vpop.xlane.xlu0 %375
        %v377 = vsel %vm165, %v355, 0.0
        %378 = vadd.xlane.f32.xlu0 %v377
        %v379 = vpop.xlane.xlu0 %378
        %v380 = vsel %vm165, %v356, 0.0
        %381 = vadd.xlane.f32.xlu0 %v380
        %v382 = vpop.xlane.xlu0 %381
        %v383 = vsel %vm165, %v357, 0.0
        %384 = vadd.xlane.f32.xlu0 %v383
        %v385 = vpop.xlane.xlu0 %384
        %v386 = vsel %vm165, %v358, 0.0
        %387 = vadd.xlane.f32.xlu0 %v386
        %v388 = vpop.xlane.xlu0 %387
        %v389 = vmax.f32 %v361, 1e-16
        %v390 = vmax.f32 %v364, 1e-16
        %v391 = vmax.f32 %v367, 1e-16
        %v392 = vmax.f32 %v370, 1e-16
        %v393 = vmax.f32 %v373, 1e-16
        %v394 = vmax.f32 %v376, 1e-16
        %v395 = vmax.f32 %v379, 1e-16
        %v396 = vmax.f32 %v382, 1e-16
        %v397 = vmax.f32 %v385, 1e-16
        %v398 = vmax.f32 %v388, 1e-16
        %v399 = vrsqrt.pop %v389
        %v400 = vmul.f32 %v399, %v389
        %v401 = vmul.f32 %v400, %v399
        %v402 = vmul.f32 0.5, %v401
        %v403 = vsub.f32 1.5, %v402
        %v404 = vmul.f32 %v399, %v403
        %vm405 = vweird.f32 %v389
        %vm406 = vweird.f32 %v399
        %vm407 = vmor %vm405, %vm406
        %v408 = vsel %vm407, %v399, %v404
        %v409 = vrsqrt.pop %v390
        %v410 = vmul.f32 %v409, %v390
        %v411 = vmul.f32 %v410, %v409
        %v412 = vmul.f32 0.5, %v411
        %v413 = vsub.f32 1.5, %v412
        %v414 = vmul.f32 %v409, %v413
        %vm415 = vweird.f32 %v390
        %vm416 = vweird.f32 %v409
        %vm417 = vmor %vm415, %vm416
        %v418 = vsel %vm417, %v409, %v414
        %v419 = vrsqrt.pop %v391
        %v420 = vmul.f32 %v419, %v391
        %v421 = vmul.f32 %v420, %v419
        %v422 = vmul.f32 0.5, %v421
        %v423 = vsub.f32 1.5, %v422
        %v424 = vmul.f32 %v419, %v423
        %vm425 = vweird.f32 %v391
        %vm426 = vweird.f32 %v419
        %vm427 = vmor %vm425, %vm426
        %v428 = vsel %vm427, %v419, %v424
        %v429 = vrsqrt.pop %v392
        %v430 = vmul.f32 %v429, %v392
        %v431 = vmul.f32 %v430, %v429
        %v432 = vmul.f32 0.5, %v431
        %v433 = vsub.f32 1.5, %v432
        %v434 = vmul.f32 %v429, %v433
        %vm435 = vweird.f32 %v392
        %vm436 = vweird.f32 %v429
        %vm437 = vmor %vm435, %vm436
        %v438 = vsel %vm437, %v429, %v434
        %v439 = vrsqrt.pop %v393
        %v440 = vmul.f32 %v439, %v393
        %v441 = vmul.f32 %v440, %v439
        %v442 = vmul.f32 0.5, %v441
        %v443 = vsub.f32 1.5, %v442
        %v444 = vmul.f32 %v439, %v443
        %vm445 = vweird.f32 %v393
        %vm446 = vweird.f32 %v439
        %vm447 = vmor %vm445, %vm446
        %v448 = vsel %vm447, %v439, %v444
        %v449 = vrsqrt.pop %v394
        %v450 = vmul.f32 %v449, %v394
        %v451 = vmul.f32 %v450, %v449
        %v452 = vmul.f32 0.5, %v451
        %v453 = vsub.f32 1.5, %v452
        %v454 = vmul.f32 %v449, %v453
        %vm455 = vweird.f32 %v394
        %vm456 = vweird.f32 %v449
        %vm457 = vmor %vm455, %vm456
        %v458 = vsel %vm457, %v449, %v454
        %v459 = vrsqrt.pop %v395
        %v460 = vmul.f32 %v459, %v395
        %v461 = vmul.f32 %v460, %v459
        %v462 = vmul.f32 0.5, %v461
        %v463 = vsub.f32 1.5, %v462
        %v464 = vmul.f32 %v459, %v463
        %vm465 = vweird.f32 %v395
        %vm466 = vweird.f32 %v459
        %vm467 = vmor %vm465, %vm466
        %v468 = vsel %vm467, %v459, %v464
        %v469 = vrsqrt.pop %v396
        %v470 = vmul.f32 %v469, %v396
        %v471 = vmul.f32 %v470, %v469
        %v472 = vmul.f32 0.5, %v471
        %v473 = vsub.f32 1.5, %v472
        %v474 = vmul.f32 %v469, %v473
        %vm475 = vweird.f32 %v396
        %vm476 = vweird.f32 %v469
        %vm477 = vmor %vm475, %vm476
        %v478 = vsel %vm477, %v469, %v474
        %v479 = vrsqrt.pop %v397
        %v480 = vmul.f32 %v479, %v397
        %v481 = vmul.f32 %v480, %v479
        %v482 = vmul.f32 0.5, %v481
        %v483 = vsub.f32 1.5, %v482
        %v484 = vmul.f32 %v479, %v483
        %vm485 = vweird.f32 %v397
        %vm486 = vweird.f32 %v479
        %vm487 = vmor %vm485, %vm486
        %v488 = vsel %vm487, %v479, %v484
        %v489 = vrsqrt.pop %v398
        %v490 = vmul.f32 %v489, %v398
        %v491 = vmul.f32 %v490, %v489
        %v492 = vmul.f32 0.5, %v491
        %v493 = vsub.f32 1.5, %v492
        %v494 = vmul.f32 %v489, %v493
        %vm495 = vweird.f32 %v398
        %vm496 = vweird.f32 %v489
        %vm497 = vmor %vm495, %vm496
        %v498 = vsel %vm497, %v489, %v494
        %v499 = vmul.f32 %v243, %v408
        %v500 = vmul.f32 %v244, %v418
        %v501 = vmul.f32 %v245, %v428
        %v502 = vmul.f32 %v246, %v438
        %v503 = vmul.f32 %v247, %v448
        %v504 = vmul.f32 %v248, %v458
        %v505 = vmul.f32 %v249, %v468
        %v506 = vmul.f32 %v250, %v478
        %v507 = vmul.f32 %v251, %v488
        %v508 = vmul.f32 %v252, %v498
        %v509 = vpack.c.bf16 %v344, %v343
        %v510 = vpack.c.bf16 %v346, %v345
        %v511 = vpack.c.bf16 %v348, %v347
        %v512 = vpack.c.bf16 %v500, %v499
        %v513 = vpack.c.bf16 %v502, %v501
        %v514 = vpack.c.bf16 %v504, %v503
        %v515 = vpack.c.bf16 %v506, %v505
        %v516 = vpack.c.bf16 %v508, %v507
        %v518 = vsel %vm165, %v509, 0
        %v521 = vsel %vm165, %v510, 0
        %v524 = vsel %vm165, %v511, 0
        %v527 = vsel %vm165, %v512, 0
        %v530 = vsel %vm165, %v513, 0
        %v533 = vsel %vm165, %v514, 0
        %v536 = vsel %vm165, %v515, 0
        %v539 = vsel %vm165, %v516, 0
        %541 = vmatpush.bf16.xpose.msra.mxu0 0
        %542 = vmatpush.bf16.xpose.msra.mxu0 0
        %543 = vmatpush.bf16.xpose.msra.mxu0 0
        %544 = vmatpush.bf16.xpose.msra.mxu0 %v539
        %545 = vmatpush.bf16.xpose.msra.mxu0 %v536
        %546 = vmatpush.bf16.xpose.msra.mxu0 %v533
        %547 = vmatpush.bf16.xpose.msra.mxu0 %v530
        %548 = vmatpush.bf16.xpose.msra.mxu0 %v527
        %549 = vmatmul.bf16.gmra.mxu0 %v518
        %v550 = vpop.f32.mrf.mxu0
        %v551 = vadd.f32 0.0, %v550
        %v552 = vpop.f32.mrf.mxu0
        %v553 = vadd.f32 0.0, %v552
        %554 = vmatmul.bf16.gmra.mxu0 %v521
        %v555 = vpop.f32.mrf.mxu0
        %v556 = vadd.f32 0.0, %v555
        %v557 = vpop.f32.mrf.mxu0
        %v558 = vadd.f32 0.0, %v557
        %559 = vmatmul.bf16.gmra.mxu0 %v524
        %v560 = vpop.f32.mrf.mxu0
        %v561 = vadd.f32 0.0, %v560
        %v562 = vpop.f32.mrf.mxu0
        %v563 = vadd.f32 0.0, %v562
        %564 = vdwg.mxu0
        %vm565 = vcmask 654336
        %566 = vst.msk [vmem:[%s139] sm:$0xff] %vm565, %v551
        %567 = vst.msk [vmem:[%s139 + $0x8] sm:$0xff] %vm565, %v553
        %568 = vst.msk [vmem:[%s139 + $0x10] sm:$0xff] %vm565, %v556
        %569 = vst.msk [vmem:[%s139 + $0x18] sm:$0xff] %vm565, %v558
        %570 = vst.msk [vmem:[%s139 + $0x20] sm:$0xff] %vm565, %v561
        %571 = vst.msk [vmem:[%s139 + $0x28] sm:$0xff] %vm565, %v563
        %s572 = sand.u32 %s71, 1
        %s573 = scalar_lea.sflag [#allocation3], %s572
        %s574 = sand.u32 %s71, 1
        %s575 = smul.addr %s574, 48
        %s576 = scalar_lea.vmem [#allocation2], %s575
        // Predicated region
        $region29: #{tpu_custom_call.1} parent=27 // pred_check
          %p577 = pneg %p81
        $region30: #{tpu_custom_call.1} parent=27 // pred_check_branch
          %579 = sbr.rel (%p577) target = $region32
        $region31: #{tpu_custom_call.1} parent=27 // pred_region
          %s580 = smul.u32 3, %s16
          %582 = vsyncadd %s573, 0
          %s583 = smul.addr %s580, 2
          %s584 = smul.addr %s583, 8
          %s585 = scalar_lea.hbm %s2, %s584
          %s586 = sshll.u32 %s576, 4
          %s587 = int_to_ptr.vmem [resolvable:$true] %s586
          %s588 = sshll.u32 %s585, 4
          %s589 = int_to_ptr.hbm [resolvable:$true] %s588
          %594 = dma.vmem_to_hbm [thread:$0]  %s587, 768, %s589, %s573, 128, 128, 8
        $region32: #{tpu_custom_call.1} parent=27 // pred_fallthru
          _
      $region28: #{tpu_custom_call.1} parent=5 // pred_fallthru
        _
      %p595 = scmp.le.s32.totalorder 2, %s11
      // Predicated region
      $region33: #{tpu_custom_call.1} parent=5 // pred_check
        %p596 = pneg %p595
      $region34: #{tpu_custom_call.1} parent=5 // pred_check_branch
        %598 = sbr.rel (%p596) target = $region36
      $region35: #{tpu_custom_call.1} parent=5 // pred_region
        %s599 = ssub.s32 %s11, 2
        // Predicated region
        $region37: #{tpu_custom_call.1} parent=35 // pred_check
          %p600 = pneg %p87
        $region38: #{tpu_custom_call.1} parent=35 // pred_check_branch
          %602 = sbr.rel (%p600) target = $region40
        $region39: #{tpu_custom_call.1} parent=35 // pred_region
          %s603 = sand.u32 %s72, 1
          %s604 = scalar_lea.sflag [#allocation3], %s603
          %s605 = sand.u32 %s72, 1
          %s606 = smul.addr %s605, 48
          %s607 = scalar_lea.vmem [#allocation2], %s606
          %609 = dma.done %s604, 768
        $region40: #{tpu_custom_call.1} parent=35 // pred_fallthru
          _
      $region36: #{tpu_custom_call.1} parent=5 // pred_fallthru
        _
    $region6: #{tpu_custom_call.1} parent=1 // loop_footer
      %s15 = sadd.s32 1, %s11
    $region7: #{tpu_custom_call.1} parent=1 // loop_footer_branch
      %10 = sbr.rel target = $region3
    $region8: #{tpu_custom_call.1} parent=1 // loop_exit
      _
    %610 = vsyncpa [#allocation3], 1
    %s611 = scalar_lea.sflag [#allocation3], 1
    %612 = vsyncpa %s611, 1

</llo_original>
